<compile_context>
chip_gen: v5e
topology: v5e:2x2
jax: 0.10.0
libtpu: 0.0.40
codegen_flags: <defaults>
</compile_context>

<pallas_src>
import jax
import jax.numpy as jnp
from jax.experimental import pallas as pl
from jax.experimental.pallas import tpu as pltpu


def _pe_add_kernel(x_ref, pe_ref, o_ref):
    # x_ref: (block_b, S*D) slab of flattened (seq, feature) rows.
    # pe_ref: (1, S*D) positional-encoding row, broadcast over the batch
    #         (sublane) dimension.
    o_ref[...] = (x_ref[...] + pe_ref[...]).astype(o_ref.dtype)


def make_positional_encoding(d_model, max_len=512, dtype=jnp.float32):
    """Constant pe table, identical to the PyTorch buffer (shape (max_len, d_model))."""
    position = jnp.arange(max_len, dtype=jnp.float32)[:, None]           # (L, 1)
    div_term = jnp.exp(
        jnp.arange(0, d_model, 2, dtype=jnp.float32)
        * (-jnp.log(jnp.float32(10000.0)) / d_model))                    # (d_model//2,)
    ang = position * div_term                                            # (L, d_model//2)
    pe = jnp.zeros((max_len, d_model), jnp.float32)
    pe = pe.at[:, 0::2].set(jnp.sin(ang))
    pe = pe.at[:, 1::2].set(jnp.cos(ang))
    return pe.astype(dtype)


def positional_encoding_add(x, pe, *, block_b=None):
    """Pallas implementation of PositionalEncoding.forward: x + pe[:, :S]."""
    B, S, D = x.shape
    SD = S * D

    # Lane-dense layout: flatten (S, D) into the lane dimension.
    x2 = x.reshape(B, SD)
    pe2 = pe[:S].reshape(1, SD).astype(x.dtype)

    # Batch blocking: one big tile when the batch is small (single grid step,
    # avoids the ~0.35 us per-step grid overhead); otherwise sublane-dense
    # multiples of 8 so every tile fully occupies the 8x128 vregs.
    if block_b is None:
        block_b = B if B <= 512 else 512
    if block_b != B:
        block_b = max(8, (block_b // 8) * 8)
    grid = (pl.cdiv(B, block_b),)

    out2 = pl.pallas_call(
        _pe_add_kernel,
        out_shape=jax.ShapeDtypeStruct((B, SD), x.dtype),
        grid_spec=pltpu.PrefetchScalarGridSpec(
            num_scalar_prefetch=0,
            grid=grid,
            in_specs=[
                pl.BlockSpec((block_b, SD), lambda i: (i, 0)),  # x slab
                pl.BlockSpec((1, SD), lambda i: (0, 0)),        # pe row (shared)
            ],
            out_specs=pl.BlockSpec((block_b, SD), lambda i: (i, 0)),
        ),
        compiler_params=pltpu.CompilerParams(
            dimension_semantics=("parallel",)),
    )(x2, pe2)

    return out2.reshape(B, S, D)


def _reference(x, pe):
    S = x.shape[1]
    return x + pe[None, :S, :].astype(x.dtype)


if __name__ == "__main__":
    B, S, D = 2, 8, 32          # batch=2, seq=8, d_model=32
    MAX_LEN = 512               # matches the PyTorch default

    key = jax.random.PRNGKey(0)
    x = jax.random.normal(key, (B, S, D), dtype=jnp.float32)

    pe = make_positional_encoding(D, max_len=MAX_LEN)

    out = positional_encoding_add(x, pe)
    out = jax.block_until_ready(out)

    ref = _reference(x, pe)
    assert out.shape == (B, S, D)
    assert jnp.allclose(out, ref, atol=1e-6, rtol=1e-6), (
        f"max abs err {jnp.max(jnp.abs(out - ref))}")

    print("KERNEL_OK")
</pallas_src>

<mosaic_0001>
module attributes {stable_mosaic.version = 11 : i64} {
  func.func @_pe_add_kernel(%arg0: i32, %arg1: memref<2x256xf32, #tpu.memory_space<vmem>>, %arg2: memref<1x256xf32, #tpu.memory_space<vmem>>, %arg3: memref<2x256xf32, #tpu.memory_space<vmem>>) attributes {dimension_semantics = [#tpu.dimension_semantics<parallel>], iteration_bounds = array<i64: 1>, scalar_prefetch = 0 : i64, scratch_operands = 0 : i64, tpu.core_type = #tpu.core_type<tc>, window_params = [{transform_indices = @transform_0, window_bounds = array<i64: 2, 256>}, {pipeline_mode = #tpu.pipeline_mode<synchronous>, transform_indices = @transform_1, window_bounds = array<i64: 1, 256>}, {transform_indices = @transform_2, window_bounds = array<i64: 2, 256>}]} {
    %c0 = arith.constant 0 : index
    %c0_0 = arith.constant 0 : index
    %0 = vector.load %arg1[%c0, %c0_0] : memref<2x256xf32, #tpu.memory_space<vmem>>, vector<2x256xf32>
    %c0_1 = arith.constant 0 : index
    %c0_2 = arith.constant 0 : index
    %1 = vector.load %arg2[%c0_1, %c0_2] : memref<1x256xf32, #tpu.memory_space<vmem>>, vector<1x256xf32>
    %2 = vector.broadcast %1 : vector<1x256xf32> to vector<2x256xf32>
    %3 = arith.addf %0, %2 : vector<2x256xf32>
    %c0_3 = arith.constant 0 : index
    %c0_4 = arith.constant 0 : index
    %4 = vector.load %arg3[%c0_3, %c0_4] : memref<2x256xf32, #tpu.memory_space<vmem>>, vector<2x256xf32>
    tpu.vector_store %arg3[%c0_3, %c0_4], %3 {strides = array<i32>} : memref<2x256xf32, #tpu.memory_space<vmem>>, vector<2x256xf32>,
    return
  }
  func.func @transform_0(%arg0: i32) -> (i32, i32) {
    %c0_i32 = arith.constant 0 : i32
    %c0_i32_0 = arith.constant 0 : i32
    return %arg0, %c0_i32 : i32, i32
  }
  func.func @transform_1(%arg0: i32) -> (i32, i32) {
    %c0_i32 = arith.constant 0 : i32
    %c0_i32_0 = arith.constant 0 : i32
    %c0_i32_1 = arith.constant 0 : i32
    return %c0_i32, %c0_i32_0 : i32, i32
  }
  func.func @transform_2(%arg0: i32) -> (i32, i32) {
    %c0_i32 = arith.constant 0 : i32
    %c0_i32_0 = arith.constant 0 : i32
    return %arg0, %c0_i32 : i32, i32
  }
}

</mosaic_0001>

<llo_original>
// kernel: tpu_custom_call.1
$region0: #{tpu_custom_call.1}
  #allocation0 [shape = 'u32[]', space=smem, size = 0x4, offset = 0x4, fixed_abs, tag = 'smem constant byte address 0x4 - core index']
  #allocation1 [shape = 'u32[72,128]{1,0:T(1,128)}', space=vmem, size = 0x9000, scoped, tag = 'internal scratch']
  %s0 = inlined_call_operand.hbm [shape: f32[2,256], index: 0, kind: input, shape index: {}]
  %s1 = inlined_call_operand.hbm [shape: f32[1,256], index: 1, kind: input, shape index: {}]
  %s2 = inlined_call_operand.hbm [shape: f32[2,256], index: 2, kind: output, shape index: {}]
  %s3 = sld [smem:[#allocation0]]
  $region26: #{tpu_custom_call.1} parent=0
    _
  %s5 = ssub.s32 1, %s3
  %s6 = scalar_select 0, %s5, %s3
  $region1: #{tpu_custom_call.1} parent=0
    #allocation2 [shape = 'u8[2048]{0}', space=vmem, size = 0x800, scoped, tag = 'input window, operand 0, single buffered']
    #allocation3 [shape = 's32[1]{0}', space=sflag, size = 0x4, scoped, tag = 'scoped memory for tpu_custom_call.1']
    #allocation4 [shape = 's32[1]{0}', space=sflag, size = 0x4, scoped, tag = 'scoped memory for tpu_custom_call.1']
    #allocation5 [shape = 'u8[1024]{0}', space=vmem, size = 0x400, scoped, tag = 'input window, operand 1, single buffered']
    #allocation6 [shape = 's32[1]{0}', space=sflag, size = 0x4, scoped, tag = 'scoped memory for tpu_custom_call.1']
    #allocation7 [shape = 'u8[2048]{0}', space=vmem, size = 0x800, scoped, tag = 'output window, operand 0, single buffered']
    %7 = vsyncpa [#allocation3], 0
    %8 = vsyncpa [#allocation6], 0
    %9 = vsyncpa [#allocation4], 0
    // Predicated region
    $region2: #{tpu_custom_call.1} parent=1 // pred_check
      _
    $region3: #{tpu_custom_call.1} parent=1 // pred_check_branch
      %11 = sbr.rel (0) target = $region5
    $region4: #{tpu_custom_call.1} parent=1 // pred_region
      %13 = vsyncadd [#allocation3], 0
      %s15 = sshll.u32 %s0, 4
      %s16 = int_to_ptr.hbm [resolvable:$true] %s15
      %s17 = sshll.u32 [#allocation2], 4
      %s18 = int_to_ptr.vmem [resolvable:$true] %s17
      %20 = dma.hbm_to_vmem [thread:$0]  %s16, 64, %s18, [#allocation3]
    $region5: #{tpu_custom_call.1} parent=1 // pred_fallthru
      _
    // Predicated region
    $region6: #{tpu_custom_call.1} parent=1 // pred_check
      _
    $region7: #{tpu_custom_call.1} parent=1 // pred_check_branch
      %22 = sbr.rel (0) target = $region9
    $region8: #{tpu_custom_call.1} parent=1 // pred_region
      %24 = vsyncadd [#allocation6], 0
      %s26 = sshll.u32 %s1, 4
      %s27 = int_to_ptr.hbm [resolvable:$true] %s26
      %s28 = sshll.u32 [#allocation5], 4
      %s29 = int_to_ptr.vmem [resolvable:$true] %s28
      %31 = dma.hbm_to_vmem [thread:$0]  %s27, 32, %s29, [#allocation6]
    $region9: #{tpu_custom_call.1} parent=1 // pred_fallthru
      _
    // Predicated region
    $region10: #{tpu_custom_call.1} parent=1 // pred_check
      _
    $region11: #{tpu_custom_call.1} parent=1 // pred_check_branch
      %33 = sbr.rel (0) target = $region13
    $region12: #{tpu_custom_call.1} parent=1 // pred_region
      %35 = dma.done [#allocation3], 64
    $region13: #{tpu_custom_call.1} parent=1 // pred_fallthru
      _
    // Predicated region
    $region14: #{tpu_custom_call.1} parent=1 // pred_check
      _
    $region15: #{tpu_custom_call.1} parent=1 // pred_check_branch
      %37 = sbr.rel (0) target = $region17
    $region16: #{tpu_custom_call.1} parent=1 // pred_region
      %39 = dma.done [#allocation6], 32
    $region17: #{tpu_custom_call.1} parent=1 // pred_fallthru
      _
    %v40 = vld [vmem:[#allocation2] sm:$0xf]
    %v41 = vld [vmem:[#allocation5] sm:$0x3]
    %v43 = vperm.slane %v41, 0
    %v44 = vperm.slane %v41, 1
    %v45 = vrot.slane %v44, 6
    %vm46 = vcmask 1041408
    %v47 = vsel %vm46, %v43, %v45
    %v49 = vadd.f32 %v40, %v47
    %50 = vst [vmem:[#allocation7] sm:$0xf] %v49
    // Predicated region
    $region18: #{tpu_custom_call.1} parent=1 // pred_check
      _
    $region19: #{tpu_custom_call.1} parent=1 // pred_check_branch
      %52 = sbr.rel (0) target = $region21
    $region20: #{tpu_custom_call.1} parent=1 // pred_region
      %54 = vsyncadd [#allocation4], 0
      %s56 = sshll.u32 [#allocation7], 4
      %s57 = int_to_ptr.vmem [resolvable:$true] %s56
      %s58 = sshll.u32 %s2, 4
      %s59 = int_to_ptr.hbm [resolvable:$true] %s58
      %61 = dma.vmem_to_hbm [thread:$0]  %s57, 64, %s59, [#allocation4]
    $region21: #{tpu_custom_call.1} parent=1 // pred_fallthru
      _
    // Predicated region
    $region22: #{tpu_custom_call.1} parent=1 // pred_check
      _
    $region23: #{tpu_custom_call.1} parent=1 // pred_check_branch
      %63 = sbr.rel (0) target = $region25
    $region24: #{tpu_custom_call.1} parent=1 // pred_region
      %65 = dma.done [#allocation4], 64
    $region25: #{tpu_custom_call.1} parent=1 // pred_fallthru
      _
    %66 = vsyncpa [#allocation3], 1
    %67 = vsyncpa [#allocation6], 1
    %68 = vsyncpa [#allocation4], 1

</llo_original>
